<compile_context>
chip_gen: v5e
topology: v5e:2x2
jax: 0.10.0
libtpu: 0.0.40
codegen_flags: <defaults>
</compile_context>

<pallas_src>
import functools

import jax
import jax.numpy as jnp
from jax.experimental import pallas as pl
from jax.experimental.pallas import tpu as pltpu

_LANES = 128
_MIN_TILE = 1024            # rows; keeps rt = tile//128 a multiple of 8
_DEFAULT_TILE_MAX = 131072  # rows; ~7 MiB double-buffered VMEM (all gens safe)
_TARGET_GRID_STEPS = 8      # >= 4 steps per v7x TensorCore + pipeline depth


def based_kernel(p_ref, x_ref, o_ref):
    # p_ref: SMEM (8,) f32 = [w1_0, w1_1, w1_2, b1, w2_1, b2_1, 0, 0]
    # x_ref: VMEM (6, RT, 128)  feature-major, batch on lanes
    # o_ref: VMEM (RT, 128) f32 lane-dense output tile
    w10, w11, w12, b1 = p_ref[0], p_ref[1], p_ref[2], p_ref[3]
    w2, b2 = p_ref[4], p_ref[5]

    def feat(k):  # (RT, 128) slab of feature k, f32 math (v5e-safe)
        return x_ref[k].astype(jnp.float32)

    z1 = feat(0) * w10 + feat(1) * w11 + feat(2) * w12 + b1
    z2 = feat(3) * w2 + b2
    z3 = feat(4) * w2 + b2
    z4 = feat(5) * w2 + b2

    # Fused product of four sigmoids: exps go to the EUP, the denominator
    # product to the VPU, and a single exact divide replaces four divides.
    den = ((1.0 + jnp.exp(-z1)) * (1.0 + jnp.exp(-z2))
           * (1.0 + jnp.exp(-z3)) * (1.0 + jnp.exp(-z4)))
    o_ref[...] = 1.0 / den


def _choose_tile(n, tile_max):
    """Adaptive tile (rows): multiple of 1024, no excess padding for small N,
    ~TARGET_GRID_STEPS grid steps for large N, capped at tile_max."""
    tile_max = max(_MIN_TILE, (int(tile_max) // _MIN_TILE) * _MIN_TILE)
    n_up = pl.cdiv(n, _MIN_TILE) * _MIN_TILE
    tile = min(tile_max, n_up)
    if n_up >= _TARGET_GRID_STEPS * _MIN_TILE:
        tile = min(tile,
                   pl.cdiv(n_up, _TARGET_GRID_STEPS * _MIN_TILE) * _MIN_TILE)
    return tile


def based_model_forward(x, params, *, tile_max=_DEFAULT_TILE_MAX,
                        features_major=False):
    """BasedModel forward.

    x: (N, 6) batch-major (default) or (6, N) with features_major=True
       (the latter skips the wrapper's HBM re-layout pass entirely).
       f32 or bf16 accepted; math is f32; returns (N, 1) f32.
    """
    w1, b1 = params["layer1"]          # (1, 3), (1,)
    w2_1, b2_1 = params["layer2_1"]    # (1, 1), (1,)
    # layer2_2 / layer2_3 exist in the module but are NOT used in forward
    # (PyTorch forward calls layer2_1 three times) — reproduced exactly.

    n = x.shape[1] if features_major else x.shape[0]
    tile = _choose_tile(n, tile_max)
    n_pad = pl.cdiv(n, tile) * tile
    rt = tile // _LANES
    grid = (n_pad // tile,)

    # Single re-layout pass (transpose + trailing-axis pad fuse under jit);
    # feature-major callers skip the transpose completely.
    if features_major:
        assert x.shape[0] == 6, x.shape
        xt = x
    else:
        assert x.shape[1] == 6, x.shape
        xt = x.T                                       # (6, N)
    if n_pad != n:
        xt = jnp.pad(xt, ((0, 0), (0, n_pad - n)))
    xr = xt.reshape(6, n_pad // _LANES, _LANES)        # free row-major reshape

    # 8 scalars for SMEM: layer1 weights+bias, layer2_1 weight+bias, padding.
    p = jnp.concatenate([
        w1.reshape(-1), b1.reshape(-1), w2_1.reshape(-1), b2_1.reshape(-1),
        jnp.zeros((2,), jnp.float32),
    ]).astype(jnp.float32)

    itemsize = jnp.dtype(x.dtype).itemsize
    cost = pl.CostEstimate(
        flops=24 * n_pad,
        transcendentals=4 * n_pad,
        bytes_accessed=6 * n_pad * itemsize + 4 * n_pad + 32,
    )

    out = pl.pallas_call(
        based_kernel,
        out_shape=jax.ShapeDtypeStruct((n_pad // _LANES, _LANES), jnp.float32),
        grid=grid,
        in_specs=[
            pl.BlockSpec(memory_space=pltpu.MemorySpace.SMEM),    # params (8,)
            pl.BlockSpec((6, rt, _LANES), lambda i: (0, i, 0)),   # x tile
        ],
        out_specs=pl.BlockSpec((rt, _LANES), lambda i: (i, 0)),   # lane-dense
        compiler_params=pltpu.CompilerParams(
            dimension_semantics=("parallel",)),
        cost_estimate=cost,
    )(p, xr)

    # Row-major (n_pad//128, 128) flattens in batch order -> free reshape.
    return out.reshape(n_pad, 1)[:n]


def init_params(key):
    """Deterministic synthetic parameters matching BasedModel.__init__ shapes."""
    ks = jax.random.split(key, 8)
    return {
        "layer1":   (jax.random.normal(ks[0], (1, 3), jnp.float32) * 0.5,
                     jax.random.normal(ks[1], (1,), jnp.float32) * 0.1),
        "layer2_1": (jax.random.normal(ks[2], (1, 1), jnp.float32) * 0.5,
                     jax.random.normal(ks[3], (1,), jnp.float32) * 0.1),
        # Present in __init__, unused in forward (kept for shape fidelity):
        "layer2_2": (jax.random.normal(ks[4], (1, 1), jnp.float32) * 0.5,
                     jax.random.normal(ks[5], (1,), jnp.float32) * 0.1),
        "layer2_3": (jax.random.normal(ks[6], (1, 1), jnp.float32) * 0.5,
                     jax.random.normal(ks[7], (1,), jnp.float32) * 0.1),
    }


def reference_forward(x, params):
    """Pure-JAX reference mirroring the PyTorch forward exactly."""
    w1, b1 = params["layer1"]
    w2_1, b2_1 = params["layer2_1"]
    sig = jax.nn.sigmoid
    x1 = sig(x[:, :3] @ w1.T + b1)
    x2_1 = sig(x[:, 3:4] @ w2_1.T + b2_1)
    x2_2 = sig(x[:, 4:5] @ w2_1.T + b2_1)
    x2_3 = sig(x[:, 5:6] @ w2_1.T + b2_1)
    return x1 * x2_1 * x2_2 * x2_3


if __name__ == "__main__":
    key = jax.random.PRNGKey(0)
    k_param, k_x = jax.random.split(key)
    params = init_params(k_param)

    # Small demo: N=1600 exercises the ragged-tail padding path (1600 -> 2048).
    N = 1600
    x = jax.random.normal(k_x, (N, 6), jnp.float32)
    ref = reference_forward(x, params)

    # 1) Default adaptive tile (single grid step at this N, tile shrunk to 2048).
    fwd = jax.jit(based_model_forward)
    out = jax.block_until_ready(fwd(x, params))
    assert out.shape == (N, 1), out.shape
    assert jnp.allclose(out, ref, atol=1e-5, rtol=1e-5), float(
        jnp.max(jnp.abs(out - ref)))

    # 2) Small tile cap -> multi-step parallel grid / pipelining path.
    fwd_small = jax.jit(functools.partial(based_model_forward, tile_max=1024))
    out2 = jax.block_until_ready(fwd_small(x, params))
    assert jnp.allclose(out2, ref, atol=1e-5, rtol=1e-5), float(
        jnp.max(jnp.abs(out2 - ref)))

    # 3) Feature-major (6, N) input path — skips the wrapper re-layout.
    fwd_fm = jax.jit(functools.partial(based_model_forward,
                                       features_major=True))
    out3 = jax.block_until_ready(fwd_fm(x.T, params))
    assert jnp.allclose(out3, ref, atol=1e-5, rtol=1e-5), float(
        jnp.max(jnp.abs(out3 - ref)))

    print("KERNEL_OK")
</pallas_src>

<mosaic_0001>
module attributes {stable_mosaic.version = 11 : i64} {
  func.func @based_kernel(%arg0: i32, %arg1: memref<8xf32, #tpu.memory_space<smem>>, %arg2: memref<6x16x128xf32, #tpu.memory_space<vmem>>, %arg3: memref<16x128xf32, #tpu.memory_space<vmem>>) attributes {dimension_semantics = [#tpu.dimension_semantics<parallel>], iteration_bounds = array<i64: 1>, scalar_prefetch = 0 : i64, scratch_operands = 0 : i64, tpu.core_type = #tpu.core_type<tc>, window_params = [{transform_indices = @transform_0, window_bounds = array<i64: 8>}, {transform_indices = @transform_1, window_bounds = array<i64: 6, 16, 128>}, {transform_indices = @transform_2, window_bounds = array<i64: 16, 128>}]} {
    %c0 = arith.constant 0 : index
    %0 = memref.load %arg1[%c0] : memref<8xf32, #tpu.memory_space<smem>>
    %c1 = arith.constant 1 : index
    %1 = memref.load %arg1[%c1] : memref<8xf32, #tpu.memory_space<smem>>
    %c2 = arith.constant 2 : index
    %2 = memref.load %arg1[%c2] : memref<8xf32, #tpu.memory_space<smem>>
    %c3 = arith.constant 3 : index
    %3 = memref.load %arg1[%c3] : memref<8xf32, #tpu.memory_space<smem>>
    %c4 = arith.constant 4 : index
    %4 = memref.load %arg1[%c4] : memref<8xf32, #tpu.memory_space<smem>>
    %c5 = arith.constant 5 : index
    %5 = memref.load %arg1[%c5] : memref<8xf32, #tpu.memory_space<smem>>
    %c0_0 = arith.constant 0 : index
    %c0_1 = arith.constant 0 : index
    %c0_2 = arith.constant 0 : index
    %6 = vector.load %arg2[%c0_0, %c0_1, %c0_2] : memref<6x16x128xf32, #tpu.memory_space<vmem>>, vector<1x16x128xf32>
    %7 = vector.shape_cast %6 : vector<1x16x128xf32> to vector<16x128xf32>
    %8 = vector.broadcast %0 : f32 to vector<16x128xf32>
    %9 = arith.mulf %7, %8 : vector<16x128xf32>
    %c1_3 = arith.constant 1 : index
    %c0_4 = arith.constant 0 : index
    %c0_5 = arith.constant 0 : index
    %10 = vector.load %arg2[%c1_3, %c0_4, %c0_5] : memref<6x16x128xf32, #tpu.memory_space<vmem>>, vector<1x16x128xf32>
    %11 = vector.shape_cast %10 : vector<1x16x128xf32> to vector<16x128xf32>
    %12 = vector.broadcast %1 : f32 to vector<16x128xf32>
    %13 = arith.mulf %11, %12 : vector<16x128xf32>
    %14 = arith.addf %9, %13 : vector<16x128xf32>
    %c2_6 = arith.constant 2 : index
    %c0_7 = arith.constant 0 : index
    %c0_8 = arith.constant 0 : index
    %15 = vector.load %arg2[%c2_6, %c0_7, %c0_8] : memref<6x16x128xf32, #tpu.memory_space<vmem>>, vector<1x16x128xf32>
    %16 = vector.shape_cast %15 : vector<1x16x128xf32> to vector<16x128xf32>
    %17 = vector.broadcast %2 : f32 to vector<16x128xf32>
    %18 = arith.mulf %16, %17 : vector<16x128xf32>
    %19 = arith.addf %14, %18 : vector<16x128xf32>
    %20 = vector.broadcast %3 : f32 to vector<16x128xf32>
    %21 = arith.addf %19, %20 : vector<16x128xf32>
    %c3_9 = arith.constant 3 : index
    %c0_10 = arith.constant 0 : index
    %c0_11 = arith.constant 0 : index
    %22 = vector.load %arg2[%c3_9, %c0_10, %c0_11] : memref<6x16x128xf32, #tpu.memory_space<vmem>>, vector<1x16x128xf32>
    %23 = vector.shape_cast %22 : vector<1x16x128xf32> to vector<16x128xf32>
    %24 = vector.broadcast %4 : f32 to vector<16x128xf32>
    %25 = arith.mulf %23, %24 : vector<16x128xf32>
    %26 = vector.broadcast %5 : f32 to vector<16x128xf32>
    %27 = arith.addf %25, %26 : vector<16x128xf32>
    %c4_12 = arith.constant 4 : index
    %c0_13 = arith.constant 0 : index
    %c0_14 = arith.constant 0 : index
    %28 = vector.load %arg2[%c4_12, %c0_13, %c0_14] : memref<6x16x128xf32, #tpu.memory_space<vmem>>, vector<1x16x128xf32>
    %29 = vector.shape_cast %28 : vector<1x16x128xf32> to vector<16x128xf32>
    %30 = vector.broadcast %4 : f32 to vector<16x128xf32>
    %31 = arith.mulf %29, %30 : vector<16x128xf32>
    %32 = vector.broadcast %5 : f32 to vector<16x128xf32>
    %33 = arith.addf %31, %32 : vector<16x128xf32>
    %c5_15 = arith.constant 5 : index
    %c0_16 = arith.constant 0 : index
    %c0_17 = arith.constant 0 : index
    %34 = vector.load %arg2[%c5_15, %c0_16, %c0_17] : memref<6x16x128xf32, #tpu.memory_space<vmem>>, vector<1x16x128xf32>
    %35 = vector.shape_cast %34 : vector<1x16x128xf32> to vector<16x128xf32>
    %36 = vector.broadcast %4 : f32 to vector<16x128xf32>
    %37 = arith.mulf %35, %36 : vector<16x128xf32>
    %38 = vector.broadcast %5 : f32 to vector<16x128xf32>
    %39 = arith.addf %37, %38 : vector<16x128xf32>
    %cst = arith.constant 0.000000e+00 : f32
    %40 = vector.broadcast %cst : f32 to vector<16x128xf32>
    %41 = arith.subf %40, %21 : vector<16x128xf32>
    %42 = math.exp %41 : vector<16x128xf32>
    %cst_18 = arith.constant 1.000000e+00 : f32
    %43 = vector.broadcast %cst_18 : f32 to vector<16x128xf32>
    %44 = arith.addf %43, %42 : vector<16x128xf32>
    %cst_19 = arith.constant 0.000000e+00 : f32
    %45 = vector.broadcast %cst_19 : f32 to vector<16x128xf32>
    %46 = arith.subf %45, %27 : vector<16x128xf32>
    %47 = math.exp %46 : vector<16x128xf32>
    %cst_20 = arith.constant 1.000000e+00 : f32
    %48 = vector.broadcast %cst_20 : f32 to vector<16x128xf32>
    %49 = arith.addf %48, %47 : vector<16x128xf32>
    %50 = arith.mulf %44, %49 : vector<16x128xf32>
    %cst_21 = arith.constant 0.000000e+00 : f32
    %51 = vector.broadcast %cst_21 : f32 to vector<16x128xf32>
    %52 = arith.subf %51, %33 : vector<16x128xf32>
    %53 = math.exp %52 : vector<16x128xf32>
    %cst_22 = arith.constant 1.000000e+00 : f32
    %54 = vector.broadcast %cst_22 : f32 to vector<16x128xf32>
    %55 = arith.addf %54, %53 : vector<16x128xf32>
    %56 = arith.mulf %50, %55 : vector<16x128xf32>
    %cst_23 = arith.constant 0.000000e+00 : f32
    %57 = vector.broadcast %cst_23 : f32 to vector<16x128xf32>
    %58 = arith.subf %57, %39 : vector<16x128xf32>
    %59 = math.exp %58 : vector<16x128xf32>
    %cst_24 = arith.constant 1.000000e+00 : f32
    %60 = vector.broadcast %cst_24 : f32 to vector<16x128xf32>
    %61 = arith.addf %60, %59 : vector<16x128xf32>
    %62 = arith.mulf %56, %61 : vector<16x128xf32>
    %cst_25 = arith.constant 1.000000e+00 : f32
    %63 = vector.broadcast %cst_25 : f32 to vector<16x128xf32>
    %64 = arith.divf %63, %62 : vector<16x128xf32>
    %c0_26 = arith.constant 0 : index
    %c0_27 = arith.constant 0 : index
    %65 = vector.load %arg3[%c0_26, %c0_27] : memref<16x128xf32, #tpu.memory_space<vmem>>, vector<16x128xf32>
    tpu.vector_store %arg3[%c0_26, %c0_27], %64 {strides = array<i32>} : memref<16x128xf32, #tpu.memory_space<vmem>>, vector<16x128xf32>,
    return
  }
  func.func @transform_0(%arg0: i32) -> i32 {
    %c0_i32 = arith.constant 0 : i32
    %c0_i32_0 = arith.constant 0 : i32
    return %c0_i32 : i32
  }
  func.func @transform_1(%arg0: i32) -> (i32, i32, i32) {
    %c0_i32 = arith.constant 0 : i32
    %c0_i32_0 = arith.constant 0 : i32
    %c0_i32_1 = arith.constant 0 : i32
    return %c0_i32, %arg0, %c0_i32_0 : i32, i32, i32
  }
  func.func @transform_2(%arg0: i32) -> (i32, i32) {
    %c0_i32 = arith.constant 0 : i32
    %c0_i32_0 = arith.constant 0 : i32
    return %arg0, %c0_i32 : i32, i32
  }
}

</mosaic_0001>

<llo_original>
// kernel: based_model_forward.1
$region0: #{based_model_forward.1}
  #allocation0 [shape = 'u32[]', space=smem, size = 0x4, offset = 0x4, fixed_abs, tag = 'smem constant byte address 0x4 - core index']
  #allocation1 [shape = 'u32[72,128]{1,0:T(1,128)}', space=vmem, size = 0x9000, scoped, tag = 'internal scratch']
  %s0 = inlined_call_operand.vmem [shape: f32[8], index: 0, kind: input, shape index: {}]
  %s1 = inlined_call_operand.vmem [shape: f32[6,16,128], index: 1, kind: input, shape index: {}]
  %s2 = inlined_call_operand.vmem [shape: f32[16,128], index: 2, kind: output, shape index: {}]
  %s3 = sld [smem:[#allocation0]]
  $region22: #{based_model_forward.1} parent=0
    _
  %s5 = ssub.s32 1, %s3
  %s6 = scalar_select 0, %s5, %s3
  $region1: #{based_model_forward.1} parent=0
    #allocation2 [shape = 'u8[512]{0}', space=smem, size = 0x200, scoped, tag = 'input window, operand 0, single buffered']
    #allocation3 [shape = 's32[1]{0}', space=sflag, size = 0x4, scoped, tag = 'scoped memory for based_model_forward.1']
    %7 = vsyncpa [#allocation3], 0
    // Predicated region
    $region2: #{based_model_forward.1} parent=1 // pred_check
      _
    $region3: #{based_model_forward.1} parent=1 // pred_check_branch
      %9 = sbr.rel (0) target = $region5
    $region4: #{based_model_forward.1} parent=1 // pred_region
      %11 = vsyncadd [#allocation3], 0
      %s13 = sshll.u32 %s0, 4
      %s14 = int_to_ptr.vmem [resolvable:$true] %s13
      %16 = dma.vmem_to_smem %s14, 16, [#allocation2], [#allocation3]
    $region5: #{based_model_forward.1} parent=1 // pred_fallthru
      _
    // Predicated region
    $region6: #{based_model_forward.1} parent=1 // pred_check
      _
    $region7: #{based_model_forward.1} parent=1 // pred_check_branch
      %18 = sbr.rel (0) target = $region9
    $region8: #{based_model_forward.1} parent=1 // pred_region
      _
    $region9: #{based_model_forward.1} parent=1 // pred_fallthru
      _
    // Predicated region
    $region10: #{based_model_forward.1} parent=1 // pred_check
      _
    $region11: #{based_model_forward.1} parent=1 // pred_check_branch
      %20 = sbr.rel (0) target = $region13
    $region12: #{based_model_forward.1} parent=1 // pred_region
      %22 = dma.done [#allocation3], 16
    $region13: #{based_model_forward.1} parent=1 // pred_fallthru
      _
    %23 = sfence
    %s24 = sld [smem:[#allocation2]]
    %s25 = sld [smem:[#allocation2 + $0x1]]
    %s26 = sld [smem:[#allocation2 + $0x2]]
    %s27 = sld [smem:[#allocation2 + $0x3]]
    %s28 = sld [smem:[#allocation2 + $0x4]]
    %s29 = sld [smem:[#allocation2 + $0x5]]
    %v30 = vld [vmem:[%s1] sm:$0xff]
    %v31 = vld [vmem:[%s1 + $0x8] sm:$0xff]
    %v32 = vstv %s24
    %v33 = vmul.f32 %v30, %v32
    %v34 = vmul.f32 %v31, %v32
    %s35 = scalar_lea.vmem %s1, 16
    %v36 = vld [vmem:[%s35] sm:$0xff]
    %v37 = vld [vmem:[%s35 + $0x8] sm:$0xff]
    %v38 = vstv %s25
    %v39 = vmul.f32 %v36, %v38
    %v40 = vmul.f32 %v37, %v38
    %v41 = vadd.f32 %v33, %v39
    %v42 = vadd.f32 %v34, %v40
    %s43 = scalar_lea.vmem %s1, 32
    %v44 = vld [vmem:[%s43] sm:$0xff]
    %v45 = vld [vmem:[%s43 + $0x8] sm:$0xff]
    %v46 = vstv %s26
    %v47 = vmul.f32 %v44, %v46
    %v48 = vmul.f32 %v45, %v46
    %v49 = vadd.f32 %v41, %v47
    %v50 = vadd.f32 %v42, %v48
    %v51 = vstv %s27
    %v52 = vadd.f32 %v49, %v51
    %v53 = vadd.f32 %v50, %v51
    %s54 = scalar_lea.vmem %s1, 48
    %v55 = vld [vmem:[%s54] sm:$0xff]
    %v56 = vld [vmem:[%s54 + $0x8] sm:$0xff]
    %v57 = vstv %s28
    %v58 = vmul.f32 %v55, %v57
    %v59 = vmul.f32 %v56, %v57
    %v60 = vstv %s29
    %v61 = vadd.f32 %v58, %v60
    %v62 = vadd.f32 %v59, %v60
    %s63 = scalar_lea.vmem %s1, 64
    %v64 = vld [vmem:[%s63] sm:$0xff]
    %v65 = vld [vmem:[%s63 + $0x8] sm:$0xff]
    %v66 = vmul.f32 %v64, %v57
    %v67 = vmul.f32 %v65, %v57
    %v68 = vadd.f32 %v66, %v60
    %v69 = vadd.f32 %v67, %v60
    %s70 = scalar_lea.vmem %s1, 80
    %v71 = vld [vmem:[%s70] sm:$0xff]
    %v72 = vld [vmem:[%s70 + $0x8] sm:$0xff]
    %v73 = vmul.f32 %v71, %v57
    %v74 = vmul.f32 %v72, %v57
    %v75 = vadd.f32 %v73, %v60
    %v76 = vadd.f32 %v74, %v60
    %v77 = vsub.f32 0.0, %v52
    %v78 = vsub.f32 0.0, %v53
    %v79 = vmul.f32 %v77, 1.442695
    %v80 = vpow.pop %v79
    %v81 = vmul.f32 %v78, 1.442695
    %v82 = vpow.pop %v81
    %v83 = vadd.f32 %v80, 1.0
    %v84 = vadd.f32 %v82, 1.0
    %v85 = vsub.f32 0.0, %v61
    %v86 = vsub.f32 0.0, %v62
    %v87 = vmul.f32 %v85, 1.442695
    %v88 = vpow.pop %v87
    %v89 = vmul.f32 %v86, 1.442695
    %v90 = vpow.pop %v89
    %v91 = vadd.f32 %v88, 1.0
    %v92 = vadd.f32 %v90, 1.0
    %v93 = vmul.f32 %v83, %v91
    %v94 = vmul.f32 %v84, %v92
    %v95 = vsub.f32 0.0, %v68
    %v96 = vsub.f32 0.0, %v69
    %v97 = vmul.f32 %v95, 1.442695
    %v98 = vpow.pop %v97
    %v99 = vmul.f32 %v96, 1.442695
    %v100 = vpow.pop %v99
    %v101 = vadd.f32 %v98, 1.0
    %v102 = vadd.f32 %v100, 1.0
    %v103 = vmul.f32 %v93, %v101
    %v104 = vmul.f32 %v94, %v102
    %v105 = vsub.f32 0.0, %v75
    %v106 = vsub.f32 0.0, %v76
    %v107 = vmul.f32 %v105, 1.442695
    %v108 = vpow.pop %v107
    %v109 = vmul.f32 %v106, 1.442695
    %v110 = vpow.pop %v109
    %v111 = vadd.f32 %v108, 1.0
    %v112 = vadd.f32 %v110, 1.0
    %v113 = vmul.f32 %v103, %v111
    %v114 = vmul.f32 %v104, %v112
    %v115 = vrcp.pop %v113
    %v116 = vmul.f32 %v113, %v115
    %v117 = vsub.f32 1.0, %v116
    %v118 = vmul.f32 %v115, %v117
    %v119 = vadd.f32 %v115, %v118
    %vm120 = vweird.f32 %v113
    %vm121 = vweird.f32 %v115
    %vm122 = vmor %vm120, %vm121
    %v123 = vsel %vm122, %v115, %v119
    %v124 = vand.u32 2147483647, %v113
    %vm125 = vcmp.eq.f32.partialorder %v124, 8.507059e+37
    %v126 = vand.u32 %v113, 2147483648
    %v127 = vor.u32 1.1754944e-38, %v126
    %v128 = vsel %vm125, %v127, %v123
    %v129 = vmul.f32 1.0, %v128
    %v130 = vrcp.pop %v114
    %v131 = vmul.f32 %v114, %v130
    %v132 = vsub.f32 1.0, %v131
    %v133 = vmul.f32 %v130, %v132
    %v134 = vadd.f32 %v130, %v133
    %vm135 = vweird.f32 %v114
    %vm136 = vweird.f32 %v130
    %vm137 = vmor %vm135, %vm136
    %v138 = vsel %vm137, %v130, %v134
    %v139 = vand.u32 2147483647, %v114
    %vm140 = vcmp.eq.f32.partialorder %v139, 8.507059e+37
    %v141 = vand.u32 %v114, 2147483648
    %v142 = vor.u32 1.1754944e-38, %v141
    %v143 = vsel %vm140, %v142, %v138
    %v144 = vmul.f32 1.0, %v143
    %145 = vst [vmem:[%s2] sm:$0xff] %v129
    %146 = vst [vmem:[%s2 + $0x8] sm:$0xff] %v144
    // Predicated region
    $region14: #{based_model_forward.1} parent=1 // pred_check
      _
    $region15: #{based_model_forward.1} parent=1 // pred_check_branch
      %148 = sbr.rel (0) target = $region17
    $region16: #{based_model_forward.1} parent=1 // pred_region
      _
    $region17: #{based_model_forward.1} parent=1 // pred_fallthru
      _
    // Predicated region
    $region18: #{based_model_forward.1} parent=1 // pred_check
      _
    $region19: #{based_model_forward.1} parent=1 // pred_check_branch
      %150 = sbr.rel (0) target = $region21
    $region20: #{based_model_forward.1} parent=1 // pred_region
      _
    $region21: #{based_model_forward.1} parent=1 // pred_fallthru
      _
    %151 = vsyncpa [#allocation3], 1

</llo_original>
